<compile_context>
chip_gen: v7x
topology: tpu7x:2x2x1
jax: 0.10.0
libtpu: 0.0.40
codegen_flags: <defaults>
</compile_context>

<pallas_src>
import functools

import jax
import jax.numpy as jnp
from jax import lax
from jax.experimental import pallas as pl
from jax.experimental.pallas import tpu as pltpu


def _vmem_capacity_bytes():
    try:
        return int(pltpu.get_tpu_info().vmem_capacity_bytes)
    except Exception:
        return 64 << 20  # conservative: v7x per-TensorCore VMEM


def _vicreg_kernel(mask_ref, za_ref, zb_ref, out_ref, acc_ref, rsum_ref,
                   *, N, D, TM, n_half, sim_coeff, cov_coeff, ragged):
    i = pl.program_id(0)

    @pl.when(i == 0)
    def _init():
        acc_ref[...] = jnp.zeros_like(acc_ref)
        rsum_ref[...] = jnp.zeros_like(rsum_ref)

    za = za_ref[...]           # (TM, D) native dtype
    zb = zb_ref[...]           # (TM, D) native dtype
    m = mask_ref[...]          # (TM, 1) native dtype, {0,1}: 1 => row in z1

    if ragged:
        # Last tile may overrun N: zero invalid rows (where, not multiply,
        # so garbage NaN/Inf in the out-of-bounds region cannot leak).
        row = lax.broadcasted_iota(jnp.int32, (TM, 1), 0) + i * TM
        valid = row < N
        zero = jnp.zeros((), dtype=za.dtype)
        za = jnp.where(valid, za, zero)
        zb = jnp.where(valid, zb, zero)
        m = jnp.where(valid, m, zero)

    # repr-loss partial sums: f32 VPU path, single cross-lane reduce in finalize.
    diff = za.astype(jnp.float32) - zb.astype(jnp.float32)
    rsum_ref[...] += diff * diff

    # One fused MXU matmul per tile (native-dtype operands, f32 accumulation):
    #   za^T @ [za | m*za]  ->  [ za^T za | za^T diag(m) za ]
    rhs = jnp.concatenate([za, za * m], axis=1)          # (TM, 2D)
    contract = (((0,), (0,)), ((), ()))
    acc_ref[...] += lax.dot_general(za, rhs, contract,
                                    preferred_element_type=jnp.float32)

    @pl.when(i == pl.num_programs(0) - 1)
    def _finalize():
        inv = jnp.float32(1.0 / (n_half - 1))
        acc = acc_ref[...]                 # (D, 2D) f32
        g = acc[:, :D]                     # unscaled z_a^T z_a
        gm = acc[:, D:]                    # unscaled (m*z_a)^T z_a (symmetric)
        c1 = gm * inv
        c2 = (g - gm) * inv

        # (C1 - I)(C2 - I) = C1@C2 - C1 - C2 + I.  Never materialize eye / a / b;
        # ||M + I||_F^2 = sum(M*M) + 2*tr(M) + D.
        mmat = jnp.dot(c1, c2, preferred_element_type=jnp.float32) - c1 - c2
        rows = lax.broadcasted_iota(jnp.int32, (D, D), 0)
        cols = lax.broadcasted_iota(jnp.int32, (D, D), 1)
        tr = jnp.sum(jnp.where(rows == cols, mmat, jnp.float32(0.0)))
        fro2 = jnp.sum(mmat * mmat) + 2.0 * tr + jnp.float32(D)
        cov_loss = jnp.sqrt(jnp.maximum(fro2, jnp.float32(0.0)))

        repr_loss = jnp.sum(rsum_ref[...]) * jnp.float32(1.0 / (N * D))
        out_ref[0, 0] = (jnp.float32(sim_coeff) * repr_loss
                         + jnp.float32(cov_coeff) * cov_loss)


def unbiased_vicreg_loss(z_a, z_b, perm_key, sim_coeff=25.0, cov_coeff=1.0,
                         tm=None):
    assert z_a.shape == z_b.shape and z_a.ndim == 2
    N, D = z_a.shape
    assert N > 1                      # module's own assert
    # torch divides by N//2 - 1; N in {2,3} would divide by zero -> guard.
    assert N >= 4, "N must be >= 4 for a well-defined unbiased covariance"

    dtype = z_a.dtype
    itemsize = jnp.dtype(dtype).itemsize
    sublane = {1: 32, 2: 16}.get(itemsize, 8)

    # --- glue: emulate torch.randperm(N); encode the first half as a mask ---
    perm = jax.random.permutation(perm_key, N)
    mask = jnp.zeros((N, 1), dtype).at[perm[: N // 2], 0].set(1)

    # --- tile-size / VMEM-budget selection ------------------------------------
    vmem_cap = _vmem_capacity_bytes()
    budget = int(0.75 * vmem_cap)          # ~48 MiB on v7x, ~96 MiB on v5e/v6e

    fixed = (2 * D * D * 4                 # (D, 2D) gram accumulator
             + 4 * D * D * 4               # finalize temporaries
             + (4 << 20))                  # compiler-internal slack
    per_row = ((2 * 2 * D + 2) * itemsize  # double-buffered za/zb (+ mask)
               + 2 * D * itemsize          # concat RHS temp
               + D * 4                     # rsum accumulator row
               + 2 * D * 4)                # f32 diff temporaries
    if tm is None:
        tm_cap = max(sublane, (budget - fixed) // max(per_row, 1))
        TM = int(min(512, tm_cap))
        TM = max(sublane, (TM // sublane) * sublane)
    else:
        TM = int(tm)

    if N <= TM:
        TM = N                      # full-extent block: no padding, no masking
        grid = 1
        ragged = False
    else:
        assert TM % sublane == 0
        grid = int(pl.cdiv(N, TM))
        ragged = (N % TM) != 0      # ragged tail handled in-kernel

    est_vmem = fixed + TM * per_row
    vmem_limit = int(min(max(est_vmem, 32 << 20), budget))

    kernel = functools.partial(
        _vicreg_kernel, N=N, D=D, TM=TM, n_half=N // 2,
        sim_coeff=float(sim_coeff), cov_coeff=float(cov_coeff), ragged=ragged)

    out = pl.pallas_call(
        kernel,
        out_shape=jax.ShapeDtypeStruct((1, 1), jnp.float32),
        grid_spec=pltpu.PrefetchScalarGridSpec(
            num_scalar_prefetch=0,
            grid=(grid,),
            in_specs=[
                pl.BlockSpec((TM, 1), lambda i: (i, 0)),
                pl.BlockSpec((TM, D), lambda i: (i, 0)),
                pl.BlockSpec((TM, D), lambda i: (i, 0)),
            ],
            out_specs=pl.BlockSpec((1, 1), lambda i: (0, 0),
                                   memory_space=pltpu.MemorySpace.SMEM),
            scratch_shapes=[
                pltpu.VMEM((D, 2 * D), jnp.float32),   # [gram | masked gram]
                pltpu.VMEM((TM, D), jnp.float32),      # repr diff^2 partials
            ]),
        compiler_params=pltpu.CompilerParams(
            dimension_semantics=("arbitrary",),
            vmem_limit_bytes=vmem_limit),
    )(mask, z_a, z_b)
    return out[0, 0]


def _reference_loss(z_a, z_b, perm_key, sim_coeff=25.0, cov_coeff=1.0):
    # Pure-JAX reference mirroring the PyTorch forward exactly.
    N, D = z_a.shape
    repr_loss = jnp.mean((z_a - z_b) ** 2)
    combined = jnp.concatenate([z_a, z_b], axis=0)
    perm = jax.random.permutation(perm_key, N)
    z1 = combined[perm[: N // 2]]
    z2 = combined[perm[N // 2:]]
    cov_z1 = (z1.T @ z1) / (N // 2 - 1)
    cov_z2 = (z2.T @ z2) / (N // 2 - 1)
    eye = jnp.eye(D)
    cov_diff = (cov_z1 - eye) @ (cov_z2 - eye)
    cov_loss = jnp.sqrt(jnp.sum(cov_diff ** 2))
    return sim_coeff * repr_loss + cov_coeff * cov_loss


if __name__ == "__main__":
    key = jax.random.PRNGKey(0)
    k_a, k_b, k_perm = jax.random.split(key, 3)

    N, D = 8, 32
    z_a = jax.random.normal(k_a, (N, D), dtype=jnp.float32)
    z_b = z_a + 0.05 * jax.random.normal(k_b, (N, D), dtype=jnp.float32)

    loss = jax.block_until_ready(unbiased_vicreg_loss(z_a, z_b, k_perm))
    ref = _reference_loss(z_a, z_b, k_perm)
    assert jnp.allclose(loss, ref, rtol=1e-4, atol=1e-4), (loss, ref)

    # Exercise the multi-tile + ragged-tail path (grid=3, last tile masked).
    k_a2, k_b2, k_perm2 = jax.random.split(jax.random.PRNGKey(1), 3)
    N2, D2 = 20, 32
    z_a2 = jax.random.normal(k_a2, (N2, D2), dtype=jnp.float32)
    z_b2 = z_a2 + 0.05 * jax.random.normal(k_b2, (N2, D2), dtype=jnp.float32)
    loss2 = jax.block_until_ready(unbiased_vicreg_loss(z_a2, z_b2, k_perm2, tm=8))
    ref2 = _reference_loss(z_a2, z_b2, k_perm2)
    assert jnp.allclose(loss2, ref2, rtol=1e-4, atol=1e-4), (loss2, ref2)

    print("KERNEL_OK")
</pallas_src>

<mosaic_0001>
module attributes {stable_mosaic.version = 11 : i64} {
  func.func @_vicreg_kernel(%arg0: i32, %arg1: memref<8x1xf32, #tpu.memory_space<vmem>>, %arg2: memref<8x32xf32, #tpu.memory_space<vmem>>, %arg3: memref<8x32xf32, #tpu.memory_space<vmem>>, %arg4: memref<1x1xf32, #tpu.memory_space<smem>>, %arg5: memref<32x64xf32, #tpu.memory_space<vmem>>, %arg6: memref<8x32xf32, #tpu.memory_space<vmem>>) attributes {dimension_semantics = [#tpu.dimension_semantics<arbitrary>], iteration_bounds = array<i64: 1>, scalar_prefetch = 0 : i64, scratch_operands = 2 : i64, tpu.core_type = #tpu.core_type<tc>, window_params = [{transform_indices = @transform_0, window_bounds = array<i64: 8, 1>}, {transform_indices = @transform_1, window_bounds = array<i64: 8, 32>}, {transform_indices = @transform_2, window_bounds = array<i64: 8, 32>}, {transform_indices = @transform_3, window_bounds = array<i64: 1, 1>}]} {
    %c0_i32 = arith.constant 0 : i32
    %0 = arith.cmpi eq, %arg0, %c0_i32 : i32
    %1 = arith.extui %0 : i1 to i32
    %c0_i32_0 = arith.constant 0 : i32
    %2 = arith.cmpi ne, %1, %c0_i32_0 : i32
    scf.if %2 {
      %cst_16 = arith.constant 0.000000e+00 : f32
      %21 = vector.broadcast %cst_16 : f32 to vector<32x64xf32>
      %c0_17 = arith.constant 0 : index
      %c0_18 = arith.constant 0 : index
      %22 = vector.load %arg5[%c0_17, %c0_18] : memref<32x64xf32, #tpu.memory_space<vmem>>, vector<32x64xf32>
      tpu.vector_store %arg5[%c0_17, %c0_18], %21 {strides = array<i32>} : memref<32x64xf32, #tpu.memory_space<vmem>>, vector<32x64xf32>,
      %cst_19 = arith.constant 0.000000e+00 : f32
      %23 = vector.broadcast %cst_19 : f32 to vector<8x32xf32>
      %c0_20 = arith.constant 0 : index
      %c0_21 = arith.constant 0 : index
      %24 = vector.load %arg6[%c0_20, %c0_21] : memref<8x32xf32, #tpu.memory_space<vmem>>, vector<8x32xf32>
      tpu.vector_store %arg6[%c0_20, %c0_21], %23 {strides = array<i32>} : memref<8x32xf32, #tpu.memory_space<vmem>>, vector<8x32xf32>,
    } else {
    }
    %c0 = arith.constant 0 : index
    %c0_1 = arith.constant 0 : index
    %3 = vector.load %arg2[%c0, %c0_1] : memref<8x32xf32, #tpu.memory_space<vmem>>, vector<8x32xf32>
    %c0_2 = arith.constant 0 : index
    %c0_3 = arith.constant 0 : index
    %4 = vector.load %arg3[%c0_2, %c0_3] : memref<8x32xf32, #tpu.memory_space<vmem>>, vector<8x32xf32>
    %c0_4 = arith.constant 0 : index
    %c0_5 = arith.constant 0 : index
    %5 = vector.load %arg1[%c0_4, %c0_5] : memref<8x1xf32, #tpu.memory_space<vmem>>, vector<8x1xf32>
    %6 = arith.subf %3, %4 : vector<8x32xf32>
    %c0_6 = arith.constant 0 : index
    %c0_7 = arith.constant 0 : index
    %7 = vector.load %arg6[%c0_6, %c0_7] : memref<8x32xf32, #tpu.memory_space<vmem>>, vector<8x32xf32>
    %8 = arith.mulf %6, %6 : vector<8x32xf32>
    %9 = arith.addf %7, %8 : vector<8x32xf32>
    %c0_8 = arith.constant 0 : index
    %c0_9 = arith.constant 0 : index
    %10 = vector.load %arg6[%c0_8, %c0_9] : memref<8x32xf32, #tpu.memory_space<vmem>>, vector<8x32xf32>
    tpu.vector_store %arg6[%c0_8, %c0_9], %9 {strides = array<i32>} : memref<8x32xf32, #tpu.memory_space<vmem>>, vector<8x32xf32>,
    %11 = vector.broadcast %5 : vector<8x1xf32> to vector<8x32xf32>
    %12 = arith.mulf %3, %11 : vector<8x32xf32>
    %13 = tpu.concatenate %3, %12 in 1 : vector<8x32xf32>, vector<8x32xf32> -> vector<8x64xf32>
    %c0_10 = arith.constant 0 : index
    %c0_11 = arith.constant 0 : index
    %14 = vector.load %arg5[%c0_10, %c0_11] : memref<32x64xf32, #tpu.memory_space<vmem>>, vector<32x64xf32>
    %cst = arith.constant dense<0.000000e+00> : vector<32x64xf32>
    %15 = tpu.matmul %3, %13, %cst {dimension_numbers = #tpu.dot_dimension_numbers<[0], [0], [1], [1], [0, 1, 1, 1], [], []>} : vector<8x32xf32>, vector<8x64xf32>, vector<32x64xf32> -> vector<32x64xf32>
    %16 = arith.addf %14, %15 : vector<32x64xf32>
    %c0_12 = arith.constant 0 : index
    %c0_13 = arith.constant 0 : index
    %17 = vector.load %arg5[%c0_12, %c0_13] : memref<32x64xf32, #tpu.memory_space<vmem>>, vector<32x64xf32>
    tpu.vector_store %arg5[%c0_12, %c0_13], %16 {strides = array<i32>} : memref<32x64xf32, #tpu.memory_space<vmem>>, vector<32x64xf32>,
    %c0_i32_14 = arith.constant 0 : i32
    %18 = arith.cmpi eq, %arg0, %c0_i32_14 : i32
    %19 = arith.extui %18 : i1 to i32
    %c0_i32_15 = arith.constant 0 : i32
    %20 = arith.cmpi ne, %19, %c0_i32_15 : i32
    scf.if %20 {
      %c0_16 = arith.constant 0 : index
      %c0_17 = arith.constant 0 : index
      %21 = vector.load %arg5[%c0_16, %c0_17] : memref<32x64xf32, #tpu.memory_space<vmem>>, vector<32x64xf32>
      %22 = vector.extract_strided_slice %21 {offsets = [0, 0], sizes = [32, 32], strides = [1, 1]} : vector<32x64xf32> to vector<32x32xf32>
      %23 = vector.extract_strided_slice %21 {offsets = [0, 32], sizes = [32, 32], strides = [1, 1]} : vector<32x64xf32> to vector<32x32xf32>
      %cst_18 = arith.constant 0.333333343 : f32
      %24 = vector.broadcast %cst_18 : f32 to vector<32x32xf32>
      %25 = arith.mulf %23, %24 : vector<32x32xf32>
      %26 = arith.subf %22, %23 : vector<32x32xf32>
      %cst_19 = arith.constant 0.333333343 : f32
      %27 = vector.broadcast %cst_19 : f32 to vector<32x32xf32>
      %28 = arith.mulf %26, %27 : vector<32x32xf32>
      %cst_20 = arith.constant dense<0.000000e+00> : vector<32x32xf32>
      %29 = tpu.matmul %25, %28, %cst_20 {dimension_numbers = #tpu.dot_dimension_numbers<[1], [0], [0], [1], [0, 0, 1, 1], [], []>} : vector<32x32xf32>, vector<32x32xf32>, vector<32x32xf32> -> vector<32x32xf32>
      %30 = arith.subf %29, %25 : vector<32x32xf32>
      %31 = arith.subf %30, %28 : vector<32x32xf32>
      %32 = tpu.iota {dimensions = array<i32: 0>} : vector<32x32xi32>
      %33 = tpu.iota {dimensions = array<i32: 1>} : vector<32x32xi32>
      %34 = arith.cmpi eq, %32, %33 : vector<32x32xi32>
      %cst_21 = arith.constant 0.000000e+00 : f32
      %35 = vector.broadcast %cst_21 : f32 to vector<32x32xf32>
      %36 = arith.select %34, %31, %35 : vector<32x32xi1>, vector<32x32xf32>
      %37 = vector.shape_cast %36 : vector<32x32xf32> to vector<1x32x32xf32>
      %cst_22 = arith.constant dense<0.000000e+00> : vector<1xf32>
      %38 = vector.multi_reduction <add>, %37, %cst_22 [1, 2] : vector<1x32x32xf32> to vector<1xf32>
      %39 = vector.shape_cast %38 : vector<1xf32> to vector<1x1x1xf32>
      %40 = vector.extract %39[0, 0, 0] : f32 from vector<1x1x1xf32>
      %41 = arith.mulf %31, %31 : vector<32x32xf32>
      %42 = vector.shape_cast %41 : vector<32x32xf32> to vector<1x32x32xf32>
      %cst_23 = arith.constant dense<0.000000e+00> : vector<1xf32>
      %43 = vector.multi_reduction <add>, %42, %cst_23 [1, 2] : vector<1x32x32xf32> to vector<1xf32>
      %44 = vector.shape_cast %43 : vector<1xf32> to vector<1x1x1xf32>
      %45 = vector.extract %44[0, 0, 0] : f32 from vector<1x1x1xf32>
      %cst_24 = arith.constant 2.000000e+00 : f32
      %46 = arith.mulf %cst_24, %40 : f32
      %47 = arith.addf %45, %46 : f32
      %cst_25 = arith.constant 3.200000e+01 : f32
      %48 = arith.addf %47, %cst_25 : f32
      %cst_26 = arith.constant 0.000000e+00 : f32
      %49 = arith.maximumf %48, %cst_26 : f32
      %50 = math.sqrt %49 : f32
      %c0_27 = arith.constant 0 : index
      %c0_28 = arith.constant 0 : index
      %51 = vector.load %arg6[%c0_27, %c0_28] : memref<8x32xf32, #tpu.memory_space<vmem>>, vector<8x32xf32>
      %52 = vector.shape_cast %51 : vector<8x32xf32> to vector<1x8x32xf32>
      %cst_29 = arith.constant dense<0.000000e+00> : vector<1xf32>
      %53 = vector.multi_reduction <add>, %52, %cst_29 [1, 2] : vector<1x8x32xf32> to vector<1xf32>
      %54 = vector.shape_cast %53 : vector<1xf32> to vector<1x1x1xf32>
      %55 = vector.extract %54[0, 0, 0] : f32 from vector<1x1x1xf32>
      %cst_30 = arith.constant 3.906250e-03 : f32
      %56 = arith.mulf %55, %cst_30 : f32
      %cst_31 = arith.constant 2.500000e+01 : f32
      %57 = arith.mulf %cst_31, %56 : f32
      %cst_32 = arith.constant 1.000000e+00 : f32
      %58 = arith.mulf %cst_32, %50 : f32
      %59 = arith.addf %57, %58 : f32
      %c0_33 = arith.constant 0 : index
      %c0_34 = arith.constant 0 : index
      %60 = memref.load %arg4[%c0_33, %c0_34] : memref<1x1xf32, #tpu.memory_space<smem>>
      memref.store %59, %arg4[%c0_33, %c0_34] : memref<1x1xf32, #tpu.memory_space<smem>>
    } else {
    }
    return
  }
  func.func @transform_0(%arg0: i32) -> (i32, i32) {
    %c0_i32 = arith.constant 0 : i32
    %c0_i32_0 = arith.constant 0 : i32
    return %arg0, %c0_i32 : i32, i32
  }
  func.func @transform_1(%arg0: i32) -> (i32, i32) {
    %c0_i32 = arith.constant 0 : i32
    %c0_i32_0 = arith.constant 0 : i32
    return %arg0, %c0_i32 : i32, i32
  }
  func.func @transform_2(%arg0: i32) -> (i32, i32) {
    %c0_i32 = arith.constant 0 : i32
    %c0_i32_0 = arith.constant 0 : i32
    return %arg0, %c0_i32 : i32, i32
  }
  func.func @transform_3(%arg0: i32) -> (i32, i32) {
    %c0_i32 = arith.constant 0 : i32
    %c0_i32_0 = arith.constant 0 : i32
    %c0_i32_1 = arith.constant 0 : i32
    return %c0_i32, %c0_i32_0 : i32, i32
  }
}

</mosaic_0001>

<llo_original>
// kernel: tpu_custom_call.1
$region0: #{tpu_custom_call.1}
  #allocation0 [shape = 'u32[]', space=smem, size = 0x4, offset = 0x4, fixed_abs, tag = 'smem constant byte address 0x4 - core index']
  #allocation1 [shape = 'u32[144,128]{1,0:T(1,128)}', space=vmem, size = 0x12000, scoped, tag = 'internal scratch']
  #allocation2 [shape = 'f32[32,64]{1,0:T(8,128)}', space=vmem, size = 0x4000, scoped, tag = 'scratch operand']
  #allocation3 [shape = 'f32[8,32]{1,0:T(8,128)}', space=vmem, size = 0x1000, scoped, tag = 'scratch operand']
  %s0 = inlined_call_operand.vmem [shape: f32[8,1], index: 0, kind: input, shape index: {}]
  %s1 = inlined_call_operand.vmem [shape: f32[8,32], index: 1, kind: input, shape index: {}]
  %s2 = inlined_call_operand.vmem [shape: f32[8,32], index: 2, kind: input, shape index: {}]
  %s3 = inlined_call_operand.hbm [shape: f32[1,1], index: 3, kind: output, shape index: {}]
  %s4 = sld [smem:[#allocation0]]
  $region30: #{tpu_custom_call.1} parent=0
    _
  %s6 = ssub.s32 1, %s4
  %s7 = scalar_select 0, %s6, %s4
  $region1: #{tpu_custom_call.1} parent=0
    #allocation4 [shape = 'u8[512]{0}', space=smem, size = 0x200, scoped, tag = 'output window, operand 0, single buffered']
    #allocation5 [shape = 's32[1]{0}', space=sflag, size = 0x4, scoped, tag = 'scoped memory for tpu_custom_call.1']
    %8 = vsyncpa [#allocation5], 0
    // Predicated region
    $region2: #{tpu_custom_call.1} parent=1 // pred_check
      _
    $region3: #{tpu_custom_call.1} parent=1 // pred_check_branch
      %10 = sbr.rel (0) target = $region5
    $region4: #{tpu_custom_call.1} parent=1 // pred_region
      _
    $region5: #{tpu_custom_call.1} parent=1 // pred_fallthru
      _
    // Predicated region
    $region6: #{tpu_custom_call.1} parent=1 // pred_check
      _
    $region7: #{tpu_custom_call.1} parent=1 // pred_check_branch
      %12 = sbr.rel (0) target = $region9
    $region8: #{tpu_custom_call.1} parent=1 // pred_region
      _
    $region9: #{tpu_custom_call.1} parent=1 // pred_fallthru
      _
    // Predicated region
    $region10: #{tpu_custom_call.1} parent=1 // pred_check
      _
    $region11: #{tpu_custom_call.1} parent=1 // pred_check_branch
      %14 = sbr.rel (0) target = $region13
    $region12: #{tpu_custom_call.1} parent=1 // pred_region
      _
    $region13: #{tpu_custom_call.1} parent=1 // pred_fallthru
      _
    %p15 = scmp.eq.s32.totalorder 0, 0
    // Predicated region
    $region14: #{tpu_custom_call.1} parent=1 // pred_check
      %p16 = pneg %p15
    $region15: #{tpu_custom_call.1} parent=1 // pred_check_branch
      %18 = sbr.rel (%p16) target = $region17
    $region16: #{tpu_custom_call.1} parent=1 // pred_region
      %vm19 = vcmask 523264
      %20 = vst.msk [vmem:[#allocation2] sm:$0xff] %vm19, 0.0
      %21 = vst.msk [vmem:[#allocation2 + $0x8] sm:$0xff] %vm19, 0.0
      %22 = vst.msk [vmem:[#allocation2 + $0x10] sm:$0xff] %vm19, 0.0
      %23 = vst.msk [vmem:[#allocation2 + $0x18] sm:$0xff] %vm19, 0.0
      %vm24 = vcmask 261120
      %25 = vst.msk [vmem:[#allocation3] sm:$0xff] %vm24, 0.0
    $region17: #{tpu_custom_call.1} parent=1 // pred_fallthru
      _
    %v26 = vld [vmem:[%s1] sm:$0xff]
    %v27 = vld [vmem:[%s2] sm:$0xff]
    %v28 = vld [vmem:[%s0] sm:$0xff]
    %v29 = vsub.f32 %v26, %v27
    %v30 = vld [vmem:[#allocation3] sm:$0xff]
    %v31 = vmul.f32 %v29, %v29
    %v32 = vadd.f32 %v30, %v31
    %vm33 = vcmask 261120
    %34 = vst.msk [vmem:[#allocation3] sm:$0xff] %vm33, %v32
    %36 = vset.pattern.permute.xlu0 0
    %37 = vperm.xlu0 %36, %v28
    %v38 = vpop.permute.xlu0 %37
    %v40 = vmul.f32 %v26, %v38
    %42 = vrot.lane.b32.xlu0 %v40, 32
    %v43 = vpop.permute.xlu0 %42
    %v45 = vsel %vm33, %v26, %v43
    %v46 = vld [vmem:[#allocation2] sm:$0xff]
    %v47 = vld [vmem:[#allocation2 + $0x8] sm:$0xff]
    %v48 = vld [vmem:[#allocation2 + $0x10] sm:$0xff]
    %v49 = vld [vmem:[#allocation2 + $0x18] sm:$0xff]
    %50 = vxpose.xlu0.b32.start [1/16] %v26, 128
    %51 = vxpose.xlu0.b32.cont [2/16] 0.0, 128
    %52 = vxpose.xlu0.b32.cont [3/16] 0.0, 128
    %53 = vxpose.xlu0.b32.cont [4/16] 0.0, 128
    %54 = vxpose.xlu0.b32.cont [5/16] 0.0, 128
    %55 = vxpose.xlu0.b32.cont [6/16] 0.0, 128
    %56 = vxpose.xlu0.b32.cont [7/16] 0.0, 128
    %57 = vxpose.xlu0.b32.cont [8/16] 0.0, 128
    %58 = vxpose.xlu0.b32.cont [9/16] 0.0, 128
    %59 = vxpose.xlu0.b32.cont [10/16] 0.0, 128
    %60 = vxpose.xlu0.b32.cont [11/16] 0.0, 128
    %61 = vxpose.xlu0.b32.cont [12/16] 0.0, 128
    %62 = vxpose.xlu0.b32.cont [13/16] 0.0, 128
    %63 = vxpose.xlu0.b32.cont [14/16] 0.0, 128
    %64 = vxpose.xlu0.b32.cont [15/16] 0.0, 128
    %65 = vxpose.xlu0.b32.end [16/16] 0.0, 128
    %v66 = vpop.trf.xlu0
    %v67 = vpop.trf.xlu0
    %v68 = vpop.trf.xlu0
    %v69 = vpop.trf.xlu0
    %v70 = vpop.trf.xlu0
    %v71 = vpop.trf.xlu0
    %v72 = vpop.trf.xlu0
    %v73 = vpop.trf.xlu0
    %v74 = vpop.trf.xlu0
    %v75 = vpop.trf.xlu0
    %v76 = vpop.trf.xlu0
    %v77 = vpop.trf.xlu0
    %v78 = vpop.trf.xlu0
    %v79 = vpop.trf.xlu0
    %v80 = vpop.trf.xlu0
    %v81 = vpop.trf.xlu0
    %vm82 = vcmask 64512
    %v84 = vsel %vm82, %v66, 0
    %v87 = vsel %vm82, %v67, 0
    %v90 = vsel %vm82, %v68, 0
    %v93 = vsel %vm82, %v69, 0
    %95 = vmatprep.subr.mxu0 0.0
    %96 = vmatpush1.msra.mxu0 %v45
    %97 = vmatprep.subr.mxu0 0.0
    %98 = vmatpush1.msra.mxu0 0.0
    %99 = vmatprep.subr.mxu0 0.0
    %100 = vmatpush1.msra.mxu0 0.0
    %101 = vmatprep.subr.mxu0 0.0
    %102 = vmatpush1.msra.mxu0 0.0
    %103 = vmatprep.subr.mxu0 0.0
    %104 = vmatpush1.msra.mxu0 0.0
    %105 = vmatprep.subr.mxu0 0.0
    %106 = vmatpush1.msra.mxu0 0.0
    %107 = vmatprep.subr.mxu0 0.0
    %108 = vmatpush1.msra.mxu0 0.0
    %109 = vmatprep.subr.mxu0 0.0
    %110 = vmatpush1.msra.mxu0 0.0
    %111 = vmatprep.subr.mxu0 0.0
    %112 = vmatpush1.msra.mxu0 0.0
    %113 = vmatprep.subr.mxu0 0.0
    %114 = vmatpush1.msra.mxu0 0.0
    %115 = vmatprep.subr.mxu0 0.0
    %116 = vmatpush1.msra.mxu0 0.0
    %117 = vmatprep.subr.mxu0 0.0
    %118 = vmatpush1.msra.mxu0 0.0
    %119 = vmatprep.subr.mxu0 0.0
    %120 = vmatpush1.msra.mxu0 0.0
    %121 = vmatprep.subr.mxu0 0.0
    %122 = vmatpush1.msra.mxu0 0.0
    %123 = vmatprep.subr.mxu0 0.0
    %124 = vmatpush1.msra.mxu0 0.0
    %125 = vmatprep.subr.mxu0 0.0
    %126 = vmatpush1.msra.mxu0 0.0
    %127 = vmatprep.subr.mxu0 0.0
    %128 = vmatpush1.msra.mxu0 0.0
    %129 = vmatprep.subr.mxu0 0.0
    %130 = vmatpush1.msra.mxu0 0.0
    %131 = vmatprep.subr.mxu0 0.0
    %132 = vmatpush1.msra.mxu0 0.0
    %133 = vmatprep.subr.mxu0 0.0
    %134 = vmatpush1.msra.mxu0 0.0
    %135 = vmatprep.subr.mxu0 0.0
    %136 = vmatpush1.msra.mxu0 0.0
    %137 = vmatprep.subr.mxu0 0.0
    %138 = vmatpush1.msra.mxu0 0.0
    %139 = vmatprep.subr.mxu0 0.0
    %140 = vmatpush1.msra.mxu0 0.0
    %141 = vmatprep.subr.mxu0 0.0
    %142 = vmatpush1.msra.mxu0 0.0
    %143 = vmatprep.subr.mxu0 0.0
    %144 = vmatpush1.msra.mxu0 0.0
    %145 = vmatprep.subr.mxu0 0.0
    %146 = vmatpush1.msra.mxu0 0.0
    %147 = vmatprep.subr.mxu0 0.0
    %148 = vmatpush1.msra.mxu0 0.0
    %149 = vmatprep.subr.mxu0 0.0
    %150 = vmatpush1.msra.mxu0 0.0
    %151 = vmatprep.subr.mxu0 0.0
    %152 = vmatpush1.msra.mxu0 0.0
    %153 = vmatprep.subr.mxu0 0.0
    %154 = vmatpush1.msra.mxu0 0.0
    %155 = vmatprep.subr.mxu0 0.0
    %156 = vmatpush1.msra.mxu0 0.0
    %157 = vmatprep.subr.mxu0 0.0
    %158 = vmatpush1.msra.mxu0 0.0
    %159 = vmatprep.mubr.f32.mxu0 0.0
    %160 = vmatmul.mubr.f32.gmra.mrb[0].mxu0 %v84
    %v161 = vpop.f32.mrb[0].mxu0
    %v162 = vadd.f32 0.0, %v161
    %v163 = vpop.f32.mrb[0].mxu0
    %164 = vmatprep.mubr.f32.mxu0 0.0
    %165 = vmatmul.mubr.f32.gmra.mrb[0].mxu0 %v87
    %v166 = vpop.f32.mrb[0].mxu0
    %v167 = vadd.f32 0.0, %v166
    %v168 = vpop.f32.mrb[0].mxu0
    %169 = vmatprep.mubr.f32.mxu0 0.0
    %170 = vmatmul.mubr.f32.gmra.mrb[0].mxu0 %v90
    %v171 = vpop.f32.mrb[0].mxu0
    %v172 = vadd.f32 0.0, %v171
    %v173 = vpop.f32.mrb[0].mxu0
    %174 = vmatprep.mubr.f32.mxu0 0.0
    %175 = vmatmul.mubr.f32.gmra.mrb[0].mxu0 %v93
    %v176 = vpop.f32.mrb[0].mxu0
    %v177 = vadd.f32 0.0, %v176
    %v178 = vpop.f32.mrb[0].mxu0
    %179 = vdwg.mxu0
    %v180 = vadd.f32 %v46, %v162
    %v181 = vadd.f32 %v47, %v167
    %v182 = vadd.f32 %v48, %v172
    %v183 = vadd.f32 %v49, %v177
    %vm184 = vcmask 523264
    %185 = vst.msk [vmem:[#allocation2] sm:$0xff] %vm184, %v180
    %186 = vst.msk [vmem:[#allocation2 + $0x8] sm:$0xff] %vm184, %v181
    %187 = vst.msk [vmem:[#allocation2 + $0x10] sm:$0xff] %vm184, %v182
    %188 = vst.msk [vmem:[#allocation2 + $0x18] sm:$0xff] %vm184, %v183
    // Predicated region
    $region18: #{tpu_custom_call.1} parent=1 // pred_check
      %p189 = pneg %p15
    $region19: #{tpu_custom_call.1} parent=1 // pred_check_branch
      %191 = sbr.rel (%p189) target = $region21
    $region20: #{tpu_custom_call.1} parent=1 // pred_region
      %v192 = vld [vmem:[#allocation2] sm:$0xff]
      %v193 = vld [vmem:[#allocation2 + $0x8] sm:$0xff]
      %v194 = vld [vmem:[#allocation2 + $0x10] sm:$0xff]
      %v195 = vld [vmem:[#allocation2 + $0x18] sm:$0xff]
      %v196 = vmul.f32 %v192, 0.33333334
      %v197 = vmul.f32 %v193, 0.33333334
      %v198 = vmul.f32 %v194, 0.33333334
      %v199 = vmul.f32 %v195, 0.33333334
      %204 = vrot.lane.b32.xlu0 %v192, 96
      %v205 = vpop.permute.xlu0 %204
      %206 = vrot.lane.b32.xlu0 %v193, 96
      %v207 = vpop.permute.xlu0 %206
      %208 = vrot.lane.b32.xlu0 %v194, 96
      %v209 = vpop.permute.xlu0 %208
      %210 = vrot.lane.b32.xlu0 %v195, 96
      %v211 = vpop.permute.xlu0 %210
      %v216 = vsub.f32 %v192, %v205
      %v217 = vsub.f32 %v193, %v207
      %v218 = vsub.f32 %v194, %v209
      %v219 = vsub.f32 %v195, %v211
      %v220 = vmul.f32 %v216, 0.33333334
      %v221 = vmul.f32 %v217, 0.33333334
      %v222 = vmul.f32 %v218, 0.33333334
      %v223 = vmul.f32 %v219, 0.33333334
      %228 = vrot.lane.b32.xlu0 %v196, 96
      %v229 = vpop.permute.xlu0 %228
      %230 = vrot.lane.b32.xlu0 %v197, 96
      %v231 = vpop.permute.xlu0 %230
      %232 = vrot.lane.b32.xlu0 %v198, 96
      %v233 = vpop.permute.xlu0 %232
      %234 = vrot.lane.b32.xlu0 %v199, 96
      %v235 = vpop.permute.xlu0 %234
      %v236 = vsel %vm33, %v229, 0
      %v238 = vsel %vm33, %v231, 0
      %v240 = vsel %vm33, %v233, 0
      %v242 = vsel %vm33, %v235, 0
      %244 = vmatprep.subr.mxu0 0.0
      %245 = vmatpush1.msra.mxu0 %v220
      %246 = vmatprep.subr.mxu0 0.0
      %247 = vmatpush1.msra.mxu0 %v221
      %248 = vmatprep.subr.mxu0 0.0
      %249 = vmatpush1.msra.mxu0 %v222
      %250 = vmatprep.subr.mxu0 0.0
      %251 = vmatpush1.msra.mxu0 %v223
      %252 = vmatprep.subr.mxu0 0.0
      %253 = vmatpush1.msra.mxu0 0.0
      %254 = vmatprep.subr.mxu0 0.0
      %255 = vmatpush1.msra.mxu0 0.0
      %256 = vmatprep.subr.mxu0 0.0
      %257 = vmatpush1.msra.mxu0 0.0
      %258 = vmatprep.subr.mxu0 0.0
      %259 = vmatpush1.msra.mxu0 0.0
      %260 = vmatprep.subr.mxu0 0.0
      %261 = vmatpush1.msra.mxu0 0.0
      %262 = vmatprep.subr.mxu0 0.0
      %263 = vmatpush1.msra.mxu0 0.0
      %264 = vmatprep.subr.mxu0 0.0
      %265 = vmatpush1.msra.mxu0 0.0
      %266 = vmatprep.subr.mxu0 0.0
      %267 = vmatpush1.msra.mxu0 0.0
      %268 = vmatprep.subr.mxu0 0.0
      %269 = vmatpush1.msra.mxu0 0.0
      %270 = vmatprep.subr.mxu0 0.0
      %271 = vmatpush1.msra.mxu0 0.0
      %272 = vmatprep.subr.mxu0 0.0
      %273 = vmatpush1.msra.mxu0 0.0
      %274 = vmatprep.subr.mxu0 0.0
      %275 = vmatpush1.msra.mxu0 0.0
      %276 = vmatprep.subr.mxu0 0.0
      %277 = vmatpush1.msra.mxu0 0.0
      %278 = vmatprep.subr.mxu0 0.0
      %279 = vmatpush1.msra.mxu0 0.0
      %280 = vmatprep.subr.mxu0 0.0
      %281 = vmatpush1.msra.mxu0 0.0
      %282 = vmatprep.subr.mxu0 0.0
      %283 = vmatpush1.msra.mxu0 0.0
      %284 = vmatprep.subr.mxu0 0.0
      %285 = vmatpush1.msra.mxu0 0.0
      %286 = vmatprep.subr.mxu0 0.0
      %287 = vmatpush1.msra.mxu0 0.0
      %288 = vmatprep.subr.mxu0 0.0
      %289 = vmatpush1.msra.mxu0 0.0
      %290 = vmatprep.subr.mxu0 0.0
      %291 = vmatpush1.msra.mxu0 0.0
      %292 = vmatprep.subr.mxu0 0.0
      %293 = vmatpush1.msra.mxu0 0.0
      %294 = vmatprep.subr.mxu0 0.0
      %295 = vmatpush1.msra.mxu0 0.0
      %296 = vmatprep.subr.mxu0 0.0
      %297 = vmatpush1.msra.mxu0 0.0
      %298 = vmatprep.subr.mxu0 0.0
      %299 = vmatpush1.msra.mxu0 0.0
      %300 = vmatprep.subr.mxu0 0.0
      %301 = vmatpush1.msra.mxu0 0.0
      %302 = vmatprep.subr.mxu0 0.0
      %303 = vmatpush1.msra.mxu0 0.0
      %304 = vmatprep.subr.mxu0 0.0
      %305 = vmatpush1.msra.mxu0 0.0
      %306 = vmatprep.subr.mxu0 0.0
      %307 = vmatpush1.msra.mxu0 0.0
      %308 = vmatprep.mubr.f32.mxu0 0.0
      %309 = vmatmul.mubr.f32.gmra.mrb[0].mxu0 %v236
      %v310 = vpop.f32.mrb[0].mxu0
      %v311 = vadd.f32 0.0, %v310
      %v312 = vpop.f32.mrb[0].mxu0
      %313 = vmatprep.mubr.f32.mxu0 0.0
      %314 = vmatmul.mubr.f32.gmra.mrb[0].mxu0 %v238
      %v315 = vpop.f32.mrb[0].mxu0
      %v316 = vadd.f32 0.0, %v315
      %v317 = vpop.f32.mrb[0].mxu0
      %318 = vmatprep.mubr.f32.mxu0 0.0
      %319 = vmatmul.mubr.f32.gmra.mrb[0].mxu0 %v240
      %v320 = vpop.f32.mrb[0].mxu0
      %v321 = vadd.f32 0.0, %v320
      %v322 = vpop.f32.mrb[0].mxu0
      %323 = vmatprep.mubr.f32.mxu0 0.0
      %324 = vmatmul.mubr.f32.gmra.mrb[0].mxu0 %v242
      %v325 = vpop.f32.mrb[0].mxu0
      %v326 = vadd.f32 0.0, %v325
      %v327 = vpop.f32.mrb[0].mxu0
      %328 = vdwg.mxu0
      %v333 = vsub.f32 %v311, %v229
      %v334 = vsub.f32 %v316, %v231
      %v335 = vsub.f32 %v321, %v233
      %v336 = vsub.f32 %v326, %v235
      %v337 = vsub.f32 %v333, %v220
      %v338 = vsub.f32 %v334, %v221
      %v339 = vsub.f32 %v335, %v222
      %v340 = vsub.f32 %v336, %v223
      %v341 = vlaneseq
      %v342 = vshrl.u32 %v341, 7
      %v343 = vadd.s32 %v342, 8
      %v344 = vadd.s32 %v342, 16
      %v345 = vadd.s32 %v342, 24
      %v346 = vlaneseq
      %v347 = vand.u32 %v346, 127
      %vm348 = vcmp.eq.s32.totalorder %v342, %v347
      %vm349 = vcmp.eq.s32.totalorder %v343, %v347
      %vm350 = vcmp.eq.s32.totalorder %v344, %v347
      %vm351 = vcmp.eq.s32.totalorder %v345, %v347
      %v352 = vsel %vm348, %v337, 0.0
      %v353 = vsel %vm349, %v338, 0.0
      %v354 = vsel %vm350, %v339, 0.0
      %v355 = vsel %vm351, %v340, 0.0
      %v356 = vsel %vm33, %v352, 0.0
      %v357 = vsel %vm33, %v353, 0.0
      %v358 = vadd.f32 %v356, %v357
      %v359 = vsel %vm33, %v354, 0.0
      %v360 = vadd.f32 %v358, %v359
      %v361 = vsel %vm33, %v355, 0.0
      %v362 = vadd.f32 %v360, %v361
      %363 = vadd.xlane.f32.xlu0 %v362
      %v364 = vpop.xlane.xlu0 %363
      %v365 = vrot.slane %v364, 4
      %v366 = vadd.f32 %v364, %v365
      %v367 = vrot.slane %v366, 2
      %v368 = vadd.f32 %v366, %v367
      %v369 = vrot.slane %v368, 1
      %v370 = vadd.f32 %v368, %v369
      %s371 = vtos %v370
      %v372 = vmul.f32 %v337, %v337
      %v373 = vmul.f32 %v338, %v338
      %v374 = vmul.f32 %v339, %v339
      %v375 = vmul.f32 %v340, %v340
      %v376 = vsel %vm33, %v372, 0.0
      %v377 = vsel %vm33, %v373, 0.0
      %v378 = vadd.f32 %v376, %v377
      %v379 = vsel %vm33, %v374, 0.0
      %v380 = vadd.f32 %v378, %v379
      %v381 = vsel %vm33, %v375, 0.0
      %v382 = vadd.f32 %v380, %v381
      %383 = vadd.xlane.f32.xlu0 %v382
      %v384 = vpop.xlane.xlu0 %383
      %v385 = vrot.slane %v384, 4
      %v386 = vadd.f32 %v384, %v385
      %v387 = vrot.slane %v386, 2
      %v388 = vadd.f32 %v386, %v387
      %v389 = vrot.slane %v388, 1
      %v390 = vadd.f32 %v388, %v389
      %s391 = vtos %v390
      %s392 = smul.f32 %s371, 2.0
      %s393 = sadd.f32 %s391, %s392
      %s394 = sadd.f32 %s393, 32.0
      %s395 = smax.f32 %s394, 0.0
      %v396 = vstv %s395
      %v397 = vrsqrt.pop %v396
      %v398 = vmul.f32 %v396, %v397
      %vm399 = vcmp.eq.f32.partialorder %v396, inf
      %v400 = vsel %vm399, %v396, %v398
      %vm401 = vcmp.eq.f32.partialorder %v396, 0.0
      %v402 = vand.u32 %v396, 2147483648
      %v403 = vsel %vm401, %v402, %v400
      %s404 = vtos %v403
      %v405 = vld [vmem:[#allocation3] sm:$0xff]
      %v406 = vsel %vm33, %v405, 0.0
      %407 = vadd.xlane.f32.xlu0 %v406
      %v408 = vpop.xlane.xlu0 %407
      %v409 = vrot.slane %v408, 4
      %v410 = vadd.f32 %v408, %v409
      %v411 = vrot.slane %v410, 2
      %v412 = vadd.f32 %v410, %v411
      %v413 = vrot.slane %v412, 1
      %v414 = vadd.f32 %v412, %v413
      %s415 = vtos %v414
      %s416 = smul.f32 %s415, 0.00390625
      %s417 = smul.f32 %s416, 25.0
      %s418 = sadd.f32 %s417, %s404
      %s419 = scalar_lea.smem [#allocation4], 0
      %420 = sst [smem:[%s419]] %s418
    $region21: #{tpu_custom_call.1} parent=1 // pred_fallthru
      _
    // Predicated region
    $region22: #{tpu_custom_call.1} parent=1 // pred_check
      _
    $region23: #{tpu_custom_call.1} parent=1 // pred_check_branch
      %422 = sbr.rel (0) target = $region25
    $region24: #{tpu_custom_call.1} parent=1 // pred_region
      %s424 = ssub.s32 16, 16
      %425 = vsyncadd [#allocation5], %s424
      %428 = dma.smem_to_hbm [#allocation4], 16, %s3, [#allocation5]
    $region25: #{tpu_custom_call.1} parent=1 // pred_fallthru
      _
    // Predicated region
    $region26: #{tpu_custom_call.1} parent=1 // pred_check
      _
    $region27: #{tpu_custom_call.1} parent=1 // pred_check_branch
      %430 = sbr.rel (0) target = $region29
    $region28: #{tpu_custom_call.1} parent=1 // pred_region
      %431 = dma.done [#allocation5], 16
    $region29: #{tpu_custom_call.1} parent=1 // pred_fallthru
      _
    %432 = sfence
    %433 = vsyncpa [#allocation5], 1

</llo_original>
